<compile_context>
chip_gen: v6e
topology: v6e:2x2x1
jax: 0.10.0
libtpu: 0.0.40
codegen_flags: <defaults>
</compile_context>

<pallas_src>
import jax
import jax.numpy as jnp
from jax.experimental import pallas as pl
from jax.experimental.pallas import tpu as pltpu

NEG_SLOPE = 0.01  # nn.LeakyReLU default negative_slope


def _leaky_relu(x):
    return jnp.where(x > 0, x, NEG_SLOPE * x)


def _combined_kernel(x_ref, we_ref, be_ref, v_ref, ex_ref,
                     w1_ref, b1_ref, w2_ref, b2_ref, w3_ref, b3_ref,
                     o_ref):
    """x_ref: [TM, S*D] (bf16 preferred).  Block-diagonal weights (host-prepared):
       we_ref [S*D, S*H] bf16, be_ref [1, S*H], v_ref [S*H, S], ex_ref [S, S*H],
       w1_ref [S*H, h1] (w1 tiled S times), w2/w3 plain, biases [1, n]."""
    x = x_ref[...].astype(jnp.bfloat16)                                     # [TM, S*D]

    # Encoder: one lane-dense MXU pass + tanh (EUP).
    h = jnp.tanh(jnp.dot(x, we_ref[...], preferred_element_type=jnp.float32)
                 + be_ref[...])                                             # [TM, S*H]

    # General-attention scores per sequence position via block-diagonal Vblk.
    s = jnp.dot(h, v_ref[...], preferred_element_type=jnp.float32)         # [TM, S]
    m = jnp.max(s, axis=-1, keepdims=True)
    p = jnp.exp(s - m)
    alpha = p * (1.0 / jnp.sum(p, axis=-1, keepdims=True))                 # [TM, S]

    # Attention-weighted hidden states, kept lane-dense: expand alpha to [TM, S*H] via matmul.
    wgt = jnp.dot(alpha, ex_ref[...], preferred_element_type=jnp.float32) * h  # [TM, S*H]

    # Regressor MLP (ctx @ w1 folded into wgt @ tile(w1, S)): S*H -> 16 -> 16 -> out_pad.
    h1 = _leaky_relu(jnp.dot(wgt, w1_ref[...], preferred_element_type=jnp.float32) + b1_ref[...])
    h2 = _leaky_relu(jnp.dot(h1, w2_ref[...], preferred_element_type=jnp.float32) + b2_ref[...])
    out = jnp.dot(h2, w3_ref[...], preferred_element_type=jnp.float32) + b3_ref[...]
    o_ref[...] = out.astype(o_ref.dtype)


def combined_forward(x, params, *, block_rows=4096, out_pad=8):
    """x: [B, S, D_in] (f32 or bf16 — fed to the kernel as-is, no wrapper cast).
    Returns [B, out_dim] float32."""
    B, S, D = x.shape
    H = params["we"].shape[1]
    h1_dim = params["w1"].shape[1]
    h2_dim = params["w2"].shape[1]
    out_dim = params["w3"].shape[1]

    # Fold the general-attention bilinear form once: score_s = h_s^T (W_a q) = h_s @ v.
    v = (params["wa"] @ params["q"].T).astype(jnp.float32)                  # [H, 1]

    # Host-side block-diagonal / tiled weight prep (done once, tiny).
    eye_s = jnp.eye(S, dtype=jnp.float32)
    we_blk = jnp.kron(eye_s, params["we"]).astype(jnp.bfloat16)             # [S*D, S*H]
    be_blk = jnp.tile(params["be"], (1, S)).astype(jnp.float32)             # [1, S*H]
    v_blk = jnp.kron(eye_s, v)                                              # [S*H, S]
    expand = jnp.kron(eye_s, jnp.ones((1, H), jnp.float32))                 # [S, S*H]
    w1_blk = jnp.tile(params["w1"], (S, 1)).astype(jnp.float32)             # [S*H, h1]

    # Lane-friendlier final store: pad last layer to out_pad columns (zeros), slice afterwards.
    pad = max(out_pad, out_dim) - out_dim
    w3p = jnp.pad(params["w3"], ((0, 0), (0, pad)))
    b3p = jnp.pad(params["b3"], ((0, 0), (0, pad)))
    o_cols = out_dim + pad

    # No dtype conversion of x in the wrapper (extra HBM round-trip); reshape is free.
    x2d = x.reshape(B, S * D)

    # Batch tile: multiple of 8 (Mosaic (8,128) rule), capped by block_rows, and capped at
    # ceil(B/2) so moderate batches still give >= 2 grid steps (v7x dual-TensorCore sharding).
    if B <= 8:
        tm = B
    else:
        tm = min(block_rows, -(-B // 2))
        tm = max(8, (tm // 8) * 8)
    grid = (pl.cdiv(B, tm),)

    def row_spec(cols):
        return pl.BlockSpec((tm, cols), lambda i: (i, 0))

    def resident(arr):  # constant block index => DMA'd once, stays VMEM-resident across steps
        shape = arr.shape
        return pl.BlockSpec(shape, lambda i: tuple(0 for _ in shape))

    flops_per_row = 2 * ((S * D) * (S * H) + (S * H) * S + S * (S * H)
                         + (S * H) * h1_dim + h1_dim * h2_dim + h2_dim * o_cols)
    trans_per_row = S * H + S
    weights = (we_blk, be_blk, v_blk, expand, w1_blk,
               params["b1"], params["w2"], params["b2"], w3p, b3p)
    weight_bytes = sum(int(w.size) * w.dtype.itemsize for w in weights)
    cost = pl.CostEstimate(
        flops=int(B * flops_per_row),
        transcendentals=int(B * trans_per_row),
        bytes_accessed=int(B * (S * D * x2d.dtype.itemsize + o_cols * 4) + weight_bytes),
    )

    out = pl.pallas_call(
        _combined_kernel,
        out_shape=jax.ShapeDtypeStruct((B, o_cols), jnp.float32),
        grid=grid,
        in_specs=[
            row_spec(S * D),
            resident(we_blk), resident(be_blk), resident(v_blk), resident(expand),
            resident(w1_blk), resident(params["b1"]),
            resident(params["w2"]), resident(params["b2"]),
            resident(w3p), resident(b3p),
        ],
        out_specs=row_spec(o_cols),
        compiler_params=pltpu.CompilerParams(
            dimension_semantics=("parallel",),     # shard batch tiles across TCs (v7x)
            vmem_limit_bytes=32 * 1024 * 1024,     # safe on v7x's 64 MiB physical VMEM
        ),
        cost_estimate=cost,
    )(x2d, we_blk, be_blk, v_blk, expand, w1_blk,
      params["b1"], params["w2"], params["b2"], w3p, b3p)

    # regressor forward ends with outputs.view(batch, -1); drop the lane padding.
    return out[:, :out_dim].reshape(B, -1)


def init_params(key, d_in, enc_hidden=32, mlp_hidden=(16, 16), out_dim=3):
    """nn.Linear-style U(-1/sqrt(fan_in), 1/sqrt(fan_in)) init. Weights stored [in, out]."""
    def linear(k, din, dout):
        kw, kb = jax.random.split(k)
        bound = 1.0 / (din ** 0.5)
        w = jax.random.uniform(kw, (din, dout), jnp.float32, -bound, bound)
        b = jax.random.uniform(kb, (1, dout), jnp.float32, -bound, bound)
        return w, b

    key, k_enc, k_wa, k_q, k1, k2, k3 = jax.random.split(key, 7)
    params = {}
    params["we"], params["be"] = linear(k_enc, d_in, enc_hidden)
    bound = 1.0 / (enc_hidden ** 0.5)
    params["wa"] = jax.random.uniform(k_wa, (enc_hidden, enc_hidden), jnp.float32, -bound, bound)
    params["q"] = jax.random.uniform(k_q, (1, enc_hidden), jnp.float32, -bound, bound)
    dims = [enc_hidden, *mlp_hidden, out_dim]
    for i, (din, dout), kk in zip((1, 2, 3), zip(dims[:-1], dims[1:]), (k1, k2, k3)):
        params[f"w{i}"], params[f"b{i}"] = linear(kk, din, dout)
    return params


def reference_forward(x, params):
    """Pure-JAX reference.  Matches the kernel's numerics: x as given (bf16 in the demo),
    encoder weight rounded to bf16 (MXU feed), all math accumulated in f32."""
    xf = x.astype(jnp.float32)
    we = params["we"].astype(jnp.bfloat16).astype(jnp.float32)
    h = jnp.tanh(jnp.einsum("bsd,dh->bsh", xf, we) + params["be"])
    v = (params["wa"] @ params["q"].T)[:, 0]                    # [H]
    scores = jnp.einsum("bsh,h->bs", h, v)
    alpha = jax.nn.softmax(scores, axis=-1)
    feat = jnp.einsum("bs,bsh->bh", alpha, h)
    z = feat
    for i in (1, 2):
        z = z @ params[f"w{i}"] + params[f"b{i}"]
        z = jnp.where(z > 0, z, NEG_SLOPE * z)
    out = z @ params["w3"] + params["b3"]
    return out.reshape(x.shape[0], -1)


if __name__ == "__main__":
    key = jax.random.PRNGKey(0)
    k_x, k_p = jax.random.split(key)

    batch, seq, d_in = 8, 8, 16
    # The input stream already lives in HBM as bf16 (no wrapper-side convert before the kernel).
    x = jax.random.normal(k_x, (batch, seq, d_in), dtype=jnp.float32).astype(jnp.bfloat16)
    params = init_params(k_p, d_in, enc_hidden=32, mlp_hidden=(16, 16), out_dim=3)

    out = combined_forward(x, params)
    jax.block_until_ready(out)

    ref = reference_forward(x, params)
    assert out.shape == (batch, 3), out.shape
    max_err = float(jnp.max(jnp.abs(out - ref)))
    assert jnp.allclose(out, ref, atol=2e-3, rtol=2e-3), max_err

    print("KERNEL_OK")
</pallas_src>

<mosaic_0001>
module attributes {stable_mosaic.version = 11 : i64} {
  func.func @_combined_kernel(%arg0: i32, %arg1: memref<8x128xbf16, #tpu.memory_space<vmem>>, %arg2: memref<128x256xbf16, #tpu.memory_space<vmem>>, %arg3: memref<1x256xf32, #tpu.memory_space<vmem>>, %arg4: memref<256x8xf32, #tpu.memory_space<vmem>>, %arg5: memref<8x256xf32, #tpu.memory_space<vmem>>, %arg6: memref<256x16xf32, #tpu.memory_space<vmem>>, %arg7: memref<1x16xf32, #tpu.memory_space<vmem>>, %arg8: memref<16x16xf32, #tpu.memory_space<vmem>>, %arg9: memref<1x16xf32, #tpu.memory_space<vmem>>, %arg10: memref<16x8xf32, #tpu.memory_space<vmem>>, %arg11: memref<1x8xf32, #tpu.memory_space<vmem>>, %arg12: memref<8x8xf32, #tpu.memory_space<vmem>>) attributes {dimension_semantics = [#tpu.dimension_semantics<parallel>], iteration_bounds = array<i64: 1>, scalar_prefetch = 0 : i64, scratch_operands = 0 : i64, tpu.core_type = #tpu.core_type<tc>, window_params = [{transform_indices = @transform_0, window_bounds = array<i64: 8, 128>}, {pipeline_mode = #tpu.pipeline_mode<synchronous>, transform_indices = @transform_1, window_bounds = array<i64: 128, 256>}, {pipeline_mode = #tpu.pipeline_mode<synchronous>, transform_indices = @transform_2, window_bounds = array<i64: 1, 256>}, {pipeline_mode = #tpu.pipeline_mode<synchronous>, transform_indices = @transform_3, window_bounds = array<i64: 256, 8>}, {pipeline_mode = #tpu.pipeline_mode<synchronous>, transform_indices = @transform_4, window_bounds = array<i64: 8, 256>}, {pipeline_mode = #tpu.pipeline_mode<synchronous>, transform_indices = @transform_5, window_bounds = array<i64: 256, 16>}, {pipeline_mode = #tpu.pipeline_mode<synchronous>, transform_indices = @transform_6, window_bounds = array<i64: 1, 16>}, {pipeline_mode = #tpu.pipeline_mode<synchronous>, transform_indices = @transform_7, window_bounds = array<i64: 16, 16>}, {pipeline_mode = #tpu.pipeline_mode<synchronous>, transform_indices = @transform_8, window_bounds = array<i64: 1, 16>}, {pipeline_mode = #tpu.pipeline_mode<synchronous>, transform_indices = @transform_9, window_bounds = array<i64: 16, 8>}, {pipeline_mode = #tpu.pipeline_mode<synchronous>, transform_indices = @transform_10, window_bounds = array<i64: 1, 8>}, {transform_indices = @transform_11, window_bounds = array<i64: 8, 8>}]} {
    %c0 = arith.constant 0 : index
    %c0_0 = arith.constant 0 : index
    %0 = vector.load %arg1[%c0, %c0_0] : memref<8x128xbf16, #tpu.memory_space<vmem>>, vector<8x128xbf16>
    %c0_1 = arith.constant 0 : index
    %c0_2 = arith.constant 0 : index
    %1 = vector.load %arg2[%c0_1, %c0_2] : memref<128x256xbf16, #tpu.memory_space<vmem>>, vector<128x256xbf16>
    %cst = arith.constant dense<0.000000e+00> : vector<8x256xf32>
    %2 = tpu.matmul %0, %1, %cst {dimension_numbers = #tpu.dot_dimension_numbers<[1], [0], [0], [1], [0, 0, 1, 1], [], []>} : vector<8x128xbf16>, vector<128x256xbf16>, vector<8x256xf32> -> vector<8x256xf32>
    %c0_3 = arith.constant 0 : index
    %c0_4 = arith.constant 0 : index
    %3 = vector.load %arg3[%c0_3, %c0_4] : memref<1x256xf32, #tpu.memory_space<vmem>>, vector<1x256xf32>
    %4 = vector.broadcast %3 : vector<1x256xf32> to vector<8x256xf32>
    %5 = arith.addf %2, %4 : vector<8x256xf32>
    %6 = math.tanh %5 : vector<8x256xf32>
    %c0_5 = arith.constant 0 : index
    %c0_6 = arith.constant 0 : index
    %7 = vector.load %arg4[%c0_5, %c0_6] : memref<256x8xf32, #tpu.memory_space<vmem>>, vector<256x8xf32>
    %cst_7 = arith.constant dense<0.000000e+00> : vector<8x8xf32>
    %8 = tpu.matmul %6, %7, %cst_7 {dimension_numbers = #tpu.dot_dimension_numbers<[1], [0], [0], [1], [0, 0, 1, 1], [], []>} : vector<8x256xf32>, vector<256x8xf32>, vector<8x8xf32> -> vector<8x8xf32>
    %cst_8 = arith.constant dense<0xFF800000> : vector<8xf32>
    %9 = vector.multi_reduction <maximumf>, %8, %cst_8 [1] : vector<8x8xf32> to vector<8xf32>
    %10 = vector.shape_cast %9 : vector<8xf32> to vector<8x1xf32>
    %11 = vector.broadcast %10 : vector<8x1xf32> to vector<8x8xf32>
    %12 = arith.subf %8, %11 : vector<8x8xf32>
    %13 = math.exp %12 : vector<8x8xf32>
    %cst_9 = arith.constant dense<0.000000e+00> : vector<8xf32>
    %14 = vector.multi_reduction <add>, %13, %cst_9 [1] : vector<8x8xf32> to vector<8xf32>
    %15 = vector.shape_cast %14 : vector<8xf32> to vector<8x1xf32>
    %cst_10 = arith.constant 1.000000e+00 : f32
    %16 = vector.broadcast %cst_10 : f32 to vector<8x1xf32>
    %17 = arith.divf %16, %15 : vector<8x1xf32>
    %18 = vector.broadcast %17 : vector<8x1xf32> to vector<8x8xf32>
    %19 = arith.mulf %13, %18 : vector<8x8xf32>
    %c0_11 = arith.constant 0 : index
    %c0_12 = arith.constant 0 : index
    %20 = vector.load %arg5[%c0_11, %c0_12] : memref<8x256xf32, #tpu.memory_space<vmem>>, vector<8x256xf32>
    %cst_13 = arith.constant dense<0.000000e+00> : vector<8x256xf32>
    %21 = tpu.matmul %19, %20, %cst_13 {dimension_numbers = #tpu.dot_dimension_numbers<[1], [0], [0], [1], [0, 0, 1, 1], [], []>} : vector<8x8xf32>, vector<8x256xf32>, vector<8x256xf32> -> vector<8x256xf32>
    %22 = arith.mulf %21, %6 : vector<8x256xf32>
    %c0_14 = arith.constant 0 : index
    %c0_15 = arith.constant 0 : index
    %23 = vector.load %arg6[%c0_14, %c0_15] : memref<256x16xf32, #tpu.memory_space<vmem>>, vector<256x16xf32>
    %cst_16 = arith.constant dense<0.000000e+00> : vector<8x16xf32>
    %24 = tpu.matmul %22, %23, %cst_16 {dimension_numbers = #tpu.dot_dimension_numbers<[1], [0], [0], [1], [0, 0, 1, 1], [], []>} : vector<8x256xf32>, vector<256x16xf32>, vector<8x16xf32> -> vector<8x16xf32>
    %c0_17 = arith.constant 0 : index
    %c0_18 = arith.constant 0 : index
    %25 = vector.load %arg7[%c0_17, %c0_18] : memref<1x16xf32, #tpu.memory_space<vmem>>, vector<1x16xf32>
    %26 = vector.broadcast %25 : vector<1x16xf32> to vector<8x16xf32>
    %27 = arith.addf %24, %26 : vector<8x16xf32>
    %cst_19 = arith.constant 0.000000e+00 : f32
    %28 = vector.broadcast %cst_19 : f32 to vector<8x16xf32>
    %29 = arith.cmpf ogt, %27, %28 : vector<8x16xf32>
    %cst_20 = arith.constant 0.00999999977 : f32
    %30 = vector.broadcast %cst_20 : f32 to vector<8x16xf32>
    %31 = arith.mulf %30, %27 : vector<8x16xf32>
    %32 = arith.select %29, %27, %31 : vector<8x16xi1>, vector<8x16xf32>
    %c0_21 = arith.constant 0 : index
    %c0_22 = arith.constant 0 : index
    %33 = vector.load %arg8[%c0_21, %c0_22] : memref<16x16xf32, #tpu.memory_space<vmem>>, vector<16x16xf32>
    %cst_23 = arith.constant dense<0.000000e+00> : vector<8x16xf32>
    %34 = tpu.matmul %32, %33, %cst_23 {dimension_numbers = #tpu.dot_dimension_numbers<[1], [0], [0], [1], [0, 0, 1, 1], [], []>} : vector<8x16xf32>, vector<16x16xf32>, vector<8x16xf32> -> vector<8x16xf32>
    %c0_24 = arith.constant 0 : index
    %c0_25 = arith.constant 0 : index
    %35 = vector.load %arg9[%c0_24, %c0_25] : memref<1x16xf32, #tpu.memory_space<vmem>>, vector<1x16xf32>
    %36 = vector.broadcast %35 : vector<1x16xf32> to vector<8x16xf32>
    %37 = arith.addf %34, %36 : vector<8x16xf32>
    %cst_26 = arith.constant 0.000000e+00 : f32
    %38 = vector.broadcast %cst_26 : f32 to vector<8x16xf32>
    %39 = arith.cmpf ogt, %37, %38 : vector<8x16xf32>
    %cst_27 = arith.constant 0.00999999977 : f32
    %40 = vector.broadcast %cst_27 : f32 to vector<8x16xf32>
    %41 = arith.mulf %40, %37 : vector<8x16xf32>
    %42 = arith.select %39, %37, %41 : vector<8x16xi1>, vector<8x16xf32>
    %c0_28 = arith.constant 0 : index
    %c0_29 = arith.constant 0 : index
    %43 = vector.load %arg10[%c0_28, %c0_29] : memref<16x8xf32, #tpu.memory_space<vmem>>, vector<16x8xf32>
    %cst_30 = arith.constant dense<0.000000e+00> : vector<8x8xf32>
    %44 = tpu.matmul %42, %43, %cst_30 {dimension_numbers = #tpu.dot_dimension_numbers<[1], [0], [0], [1], [0, 0, 1, 1], [], []>} : vector<8x16xf32>, vector<16x8xf32>, vector<8x8xf32> -> vector<8x8xf32>
    %c0_31 = arith.constant 0 : index
    %c0_32 = arith.constant 0 : index
    %45 = vector.load %arg11[%c0_31, %c0_32] : memref<1x8xf32, #tpu.memory_space<vmem>>, vector<1x8xf32>
    %46 = vector.broadcast %45 : vector<1x8xf32> to vector<8x8xf32>
    %47 = arith.addf %44, %46 : vector<8x8xf32>
    %c0_33 = arith.constant 0 : index
    %c0_34 = arith.constant 0 : index
    %48 = vector.load %arg12[%c0_33, %c0_34] : memref<8x8xf32, #tpu.memory_space<vmem>>, vector<8x8xf32>
    tpu.vector_store %arg12[%c0_33, %c0_34], %47 {strides = array<i32>} : memref<8x8xf32, #tpu.memory_space<vmem>>, vector<8x8xf32>,
    return
  }
  func.func @transform_0(%arg0: i32) -> (i32, i32) {
    %c0_i32 = arith.constant 0 : i32
    %c0_i32_0 = arith.constant 0 : i32
    return %arg0, %c0_i32 : i32, i32
  }
  func.func @transform_1(%arg0: i32) -> (i32, i32) {
    %c0_i32 = arith.constant 0 : i32
    %c0_i32_0 = arith.constant 0 : i32
    %c0_i32_1 = arith.constant 0 : i32
    return %c0_i32, %c0_i32_0 : i32, i32
  }
  func.func @transform_2(%arg0: i32) -> (i32, i32) {
    %c0_i32 = arith.constant 0 : i32
    %c0_i32_0 = arith.constant 0 : i32
    %c0_i32_1 = arith.constant 0 : i32
    return %c0_i32, %c0_i32_0 : i32, i32
  }
  func.func @transform_3(%arg0: i32) -> (i32, i32) {
    %c0_i32 = arith.constant 0 : i32
    %c0_i32_0 = arith.constant 0 : i32
    %c0_i32_1 = arith.constant 0 : i32
    return %c0_i32, %c0_i32_0 : i32, i32
  }
  func.func @transform_4(%arg0: i32) -> (i32, i32) {
    %c0_i32 = arith.constant 0 : i32
    %c0_i32_0 = arith.constant 0 : i32
    %c0_i32_1 = arith.constant 0 : i32
    return %c0_i32, %c0_i32_0 : i32, i32
  }
  func.func @transform_5(%arg0: i32) -> (i32, i32) {
    %c0_i32 = arith.constant 0 : i32
    %c0_i32_0 = arith.constant 0 : i32
    %c0_i32_1 = arith.constant 0 : i32
    return %c0_i32, %c0_i32_0 : i32, i32
  }
  func.func @transform_6(%arg0: i32) -> (i32, i32) {
    %c0_i32 = arith.constant 0 : i32
    %c0_i32_0 = arith.constant 0 : i32
    %c0_i32_1 = arith.constant 0 : i32
    return %c0_i32, %c0_i32_0 : i32, i32
  }
  func.func @transform_7(%arg0: i32) -> (i32, i32) {
    %c0_i32 = arith.constant 0 : i32
    %c0_i32_0 = arith.constant 0 : i32
    %c0_i32_1 = arith.constant 0 : i32
    return %c0_i32, %c0_i32_0 : i32, i32
  }
  func.func @transform_8(%arg0: i32) -> (i32, i32) {
    %c0_i32 = arith.constant 0 : i32
    %c0_i32_0 = arith.constant 0 : i32
    %c0_i32_1 = arith.constant 0 : i32
    return %c0_i32, %c0_i32_0 : i32, i32
  }
  func.func @transform_9(%arg0: i32) -> (i32, i32) {
    %c0_i32 = arith.constant 0 : i32
    %c0_i32_0 = arith.constant 0 : i32
    %c0_i32_1 = arith.constant 0 : i32
    return %c0_i32, %c0_i32_0 : i32, i32
  }
  func.func @transform_10(%arg0: i32) -> (i32, i32) {
    %c0_i32 = arith.constant 0 : i32
    %c0_i32_0 = arith.constant 0 : i32
    %c0_i32_1 = arith.constant 0 : i32
    return %c0_i32, %c0_i32_0 : i32, i32
  }
  func.func @transform_11(%arg0: i32) -> (i32, i32) {
    %c0_i32 = arith.constant 0 : i32
    %c0_i32_0 = arith.constant 0 : i32
    return %arg0, %c0_i32 : i32, i32
  }
}

</mosaic_0001>

<llo_original>
// kernel: tpu_custom_call.1
$region0: #{tpu_custom_call.1}
  #allocation0 [shape = 'u32[]', space=smem, size = 0x4, offset = 0x4, fixed_abs, tag = 'smem constant byte address 0x4 - core index']
  #allocation1 [shape = 'u32[144,128]{1,0:T(1,128)}', space=vmem, size = 0x12000, scoped, tag = 'internal scratch']
  %s0 = inlined_call_operand.vmem [shape: bf16[8,128], index: 0, kind: input, shape index: {}]
  %s1 = inlined_call_operand.vmem [shape: bf16[128,256], index: 1, kind: input, shape index: {}]
  %s2 = inlined_call_operand.vmem [shape: f32[1,256], index: 2, kind: input, shape index: {}]
  %s3 = inlined_call_operand.vmem [shape: f32[256,8], index: 3, kind: input, shape index: {}]
  %s4 = inlined_call_operand.vmem [shape: f32[8,256], index: 4, kind: input, shape index: {}]
  %s5 = inlined_call_operand.vmem [shape: f32[256,16], index: 5, kind: input, shape index: {}]
  %s6 = inlined_call_operand.vmem [shape: f32[1,16], index: 6, kind: input, shape index: {}]
  %s7 = inlined_call_operand.vmem [shape: f32[16,16], index: 7, kind: input, shape index: {}]
  %s8 = inlined_call_operand.vmem [shape: f32[1,16], index: 8, kind: input, shape index: {}]
  %s9 = inlined_call_operand.vmem [shape: f32[16,8], index: 9, kind: input, shape index: {}]
  %s10 = inlined_call_operand.vmem [shape: f32[1,8], index: 10, kind: input, shape index: {}]
  %s11 = inlined_call_operand.hbm [shape: f32[8,8], index: 11, kind: output, shape index: {}]
  %s12 = sld [smem:[#allocation0]]
  $region54: #{tpu_custom_call.1} parent=0
    _
  %s14 = ssub.s32 1, %s12
  %s15 = scalar_select 0, %s14, %s12
  $region1: #{tpu_custom_call.1} parent=0
    #allocation2 [shape = 'u8[4096]{0}', space=vmem, size = 0x1000, scoped, tag = 'output window, operand 0, single buffered']
    #allocation3 [shape = 's32[1]{0}', space=sflag, size = 0x4, scoped, tag = 'scoped memory for tpu_custom_call.1']
    %16 = vsyncpa [#allocation3], 0
    // Predicated region
    $region2: #{tpu_custom_call.1} parent=1 // pred_check
      _
    $region3: #{tpu_custom_call.1} parent=1 // pred_check_branch
      %18 = sbr.rel (0) target = $region5
    $region4: #{tpu_custom_call.1} parent=1 // pred_region
      _
    $region5: #{tpu_custom_call.1} parent=1 // pred_fallthru
      _
    // Predicated region
    $region6: #{tpu_custom_call.1} parent=1 // pred_check
      _
    $region7: #{tpu_custom_call.1} parent=1 // pred_check_branch
      %20 = sbr.rel (0) target = $region9
    $region8: #{tpu_custom_call.1} parent=1 // pred_region
      _
    $region9: #{tpu_custom_call.1} parent=1 // pred_fallthru
      _
    // Predicated region
    $region10: #{tpu_custom_call.1} parent=1 // pred_check
      _
    $region11: #{tpu_custom_call.1} parent=1 // pred_check_branch
      %22 = sbr.rel (0) target = $region13
    $region12: #{tpu_custom_call.1} parent=1 // pred_region
      _
    $region13: #{tpu_custom_call.1} parent=1 // pred_fallthru
      _
    // Predicated region
    $region14: #{tpu_custom_call.1} parent=1 // pred_check
      _
    $region15: #{tpu_custom_call.1} parent=1 // pred_check_branch
      %24 = sbr.rel (0) target = $region17
    $region16: #{tpu_custom_call.1} parent=1 // pred_region
      _
    $region17: #{tpu_custom_call.1} parent=1 // pred_fallthru
      _
    // Predicated region
    $region18: #{tpu_custom_call.1} parent=1 // pred_check
      _
    $region19: #{tpu_custom_call.1} parent=1 // pred_check_branch
      %26 = sbr.rel (0) target = $region21
    $region20: #{tpu_custom_call.1} parent=1 // pred_region
      _
    $region21: #{tpu_custom_call.1} parent=1 // pred_fallthru
      _
    // Predicated region
    $region22: #{tpu_custom_call.1} parent=1 // pred_check
      _
    $region23: #{tpu_custom_call.1} parent=1 // pred_check_branch
      %28 = sbr.rel (0) target = $region25
    $region24: #{tpu_custom_call.1} parent=1 // pred_region
      _
    $region25: #{tpu_custom_call.1} parent=1 // pred_fallthru
      _
    // Predicated region
    $region26: #{tpu_custom_call.1} parent=1 // pred_check
      _
    $region27: #{tpu_custom_call.1} parent=1 // pred_check_branch
      %30 = sbr.rel (0) target = $region29
    $region28: #{tpu_custom_call.1} parent=1 // pred_region
      _
    $region29: #{tpu_custom_call.1} parent=1 // pred_fallthru
      _
    // Predicated region
    $region30: #{tpu_custom_call.1} parent=1 // pred_check
      _
    $region31: #{tpu_custom_call.1} parent=1 // pred_check_branch
      %32 = sbr.rel (0) target = $region33
    $region32: #{tpu_custom_call.1} parent=1 // pred_region
      _
    $region33: #{tpu_custom_call.1} parent=1 // pred_fallthru
      _
    // Predicated region
    $region34: #{tpu_custom_call.1} parent=1 // pred_check
      _
    $region35: #{tpu_custom_call.1} parent=1 // pred_check_branch
      %34 = sbr.rel (0) target = $region37
    $region36: #{tpu_custom_call.1} parent=1 // pred_region
      _
    $region37: #{tpu_custom_call.1} parent=1 // pred_fallthru
      _
    // Predicated region
    $region38: #{tpu_custom_call.1} parent=1 // pred_check
      _
    $region39: #{tpu_custom_call.1} parent=1 // pred_check_branch
      %36 = sbr.rel (0) target = $region41
    $region40: #{tpu_custom_call.1} parent=1 // pred_region
      _
    $region41: #{tpu_custom_call.1} parent=1 // pred_fallthru
      _
    // Predicated region
    $region42: #{tpu_custom_call.1} parent=1 // pred_check
      _
    $region43: #{tpu_custom_call.1} parent=1 // pred_check_branch
      %38 = sbr.rel (0) target = $region45
    $region44: #{tpu_custom_call.1} parent=1 // pred_region
      _
    $region45: #{tpu_custom_call.1} parent=1 // pred_fallthru
      _
    %v40 = vld [vmem:[%s0] sm:$0xf]
    %v41 = vld [vmem:[%s1] sm:$0xff]
    %v42 = vld [vmem:[%s1 + $0x8] sm:$0xff]
    %v43 = vld [vmem:[%s1 + $0x10] sm:$0xff]
    %v44 = vld [vmem:[%s1 + $0x18] sm:$0xff]
    %v45 = vld [vmem:[%s1 + $0x20] sm:$0xff]
    %v46 = vld [vmem:[%s1 + $0x28] sm:$0xff]
    %v47 = vld [vmem:[%s1 + $0x30] sm:$0xff]
    %v48 = vld [vmem:[%s1 + $0x38] sm:$0xff]
    %v49 = vld [vmem:[%s1 + $0x40] sm:$0xff]
    %v50 = vld [vmem:[%s1 + $0x48] sm:$0xff]
    %v51 = vld [vmem:[%s1 + $0x50] sm:$0xff]
    %v52 = vld [vmem:[%s1 + $0x58] sm:$0xff]
    %v53 = vld [vmem:[%s1 + $0x60] sm:$0xff]
    %v54 = vld [vmem:[%s1 + $0x68] sm:$0xff]
    %v55 = vld [vmem:[%s1 + $0x70] sm:$0xff]
    %v56 = vld [vmem:[%s1 + $0x78] sm:$0xff]
    %v57 = vld [vmem:[%s2] sm:$0x3]
    %v59 = vlaneseq
    %v60 = vshrl.u32 %v59, 7
    %v61 = vsub.s32 0, %v60
    %v62 = vrot.slane %v57, %v61
    %v63 = vlaneseq
    %v64 = vshrl.u32 %v63, 7
    %v65 = vsub.s32 1, %v64
    %v66 = vrot.slane %v57, %v65
    %v85 = vunpack.c.l.b16 %v41
    %v86 = vunpack.c.h.b16 %v41
    %v87 = vunpack.c.l.b16 %v42
    %v88 = vunpack.c.h.b16 %v42
    %v89 = vunpack.c.l.b16 %v43
    %v90 = vunpack.c.h.b16 %v43
    %v91 = vunpack.c.l.b16 %v44
    %v92 = vunpack.c.h.b16 %v44
    %v93 = vunpack.c.l.b16 %v45
    %v94 = vunpack.c.h.b16 %v45
    %v95 = vunpack.c.l.b16 %v46
    %v96 = vunpack.c.h.b16 %v46
    %v97 = vunpack.c.l.b16 %v47
    %v98 = vunpack.c.h.b16 %v47
    %v99 = vunpack.c.l.b16 %v48
    %v100 = vunpack.c.h.b16 %v48
    %v101 = vunpack.c.l.b16 %v49
    %v102 = vunpack.c.h.b16 %v49
    %v103 = vunpack.c.l.b16 %v50
    %v104 = vunpack.c.h.b16 %v50
    %v105 = vunpack.c.l.b16 %v51
    %v106 = vunpack.c.h.b16 %v51
    %v107 = vunpack.c.l.b16 %v52
    %v108 = vunpack.c.h.b16 %v52
    %v109 = vunpack.c.l.b16 %v53
    %v110 = vunpack.c.h.b16 %v53
    %v111 = vunpack.c.l.b16 %v54
    %v112 = vunpack.c.h.b16 %v54
    %v113 = vunpack.c.l.b16 %v55
    %v114 = vunpack.c.h.b16 %v55
    %v115 = vunpack.c.l.b16 %v56
    %v116 = vunpack.c.h.b16 %v56
    %v117 = vpack.c.b16 %v87, %v85
    %v118 = vpack.c.b16 %v88, %v86
    %v119 = vpack.c.b16 %v91, %v89
    %v120 = vpack.c.b16 %v92, %v90
    %v121 = vpack.c.b16 %v95, %v93
    %v122 = vpack.c.b16 %v96, %v94
    %v123 = vpack.c.b16 %v99, %v97
    %v124 = vpack.c.b16 %v100, %v98
    %v125 = vpack.c.b16 %v103, %v101
    %v126 = vpack.c.b16 %v104, %v102
    %v127 = vpack.c.b16 %v107, %v105
    %v128 = vpack.c.b16 %v108, %v106
    %v129 = vpack.c.b16 %v111, %v109
    %v130 = vpack.c.b16 %v112, %v110
    %v131 = vpack.c.b16 %v115, %v113
    %v132 = vpack.c.b16 %v116, %v114
    %149 = vmatprep.subr.bf16.mxu0 %v132
    %150 = vmatpush1.bf16.msra.mxu0 %v131
    %151 = vmatprep.subr.bf16.mxu0 %v130
    %152 = vmatpush1.bf16.msra.mxu0 %v129
    %153 = vmatprep.subr.bf16.mxu0 %v128
    %154 = vmatpush1.bf16.msra.mxu0 %v127
    %155 = vmatprep.subr.bf16.mxu0 %v126
    %156 = vmatpush1.bf16.msra.mxu0 %v125
    %157 = vmatprep.subr.bf16.mxu0 %v124
    %158 = vmatpush1.bf16.msra.mxu0 %v123
    %159 = vmatprep.subr.bf16.mxu0 %v122
    %160 = vmatpush1.bf16.msra.mxu0 %v121
    %161 = vmatprep.subr.bf16.mxu0 %v120
    %162 = vmatpush1.bf16.msra.mxu0 %v119
    %163 = vmatprep.subr.bf16.mxu0 %v118
    %164 = vmatpush1.bf16.msra.mxu0 %v117
    %165 = vmatprep.subr.bf16.mxu0 0
    %166 = vmatpush2.bf16.msra.mxu0 0
    %167 = vmatprep.subr.bf16.mxu0 0
    %168 = vmatpush2.bf16.msra.mxu0 0
    %169 = vmatprep.subr.bf16.mxu0 0
    %170 = vmatpush2.bf16.msra.mxu0 0
    %171 = vmatprep.subr.bf16.mxu0 0
    %172 = vmatpush2.bf16.msra.mxu0 0
    %173 = vmatprep.subr.bf16.mxu0 0
    %174 = vmatpush2.bf16.msra.mxu0 0
    %175 = vmatprep.subr.bf16.mxu0 0
    %176 = vmatpush2.bf16.msra.mxu0 0
    %177 = vmatprep.subr.bf16.mxu0 0
    %178 = vmatpush2.bf16.msra.mxu0 0
    %179 = vmatprep.subr.bf16.mxu0 0
    %180 = vmatpush2.bf16.msra.mxu0 0
    %181 = vmatprep.mubr.bf16.mxu0 0
    %182 = vmatmul.mubr.bf16.gmra.mxu0 %v40
    %v183 = vpop.f32.mrf.mxu0
    %v184 = vadd.f32 %v62, %v183
    %v185 = vpop.f32.mrf.mxu0
    %v186 = vadd.f32 %v66, %v185
    %v187 = vpop.f32.mrf.mxu0
    %v188 = vpop.f32.mrf.mxu0
    %189 = vdwg.mxu0
    %v190 = vtanh.pop %v184
    %v191 = vtanh.pop %v186
    %v192 = vld [vmem:[%s3] sm:$0xff]
    %v193 = vld [vmem:[%s3 + $0x8] sm:$0xff]
    %v194 = vld [vmem:[%s3 + $0x10] sm:$0xff]
    %v195 = vld [vmem:[%s3 + $0x18] sm:$0xff]
    %v196 = vld [vmem:[%s3 + $0x20] sm:$0xff]
    %v197 = vld [vmem:[%s3 + $0x28] sm:$0xff]
    %v198 = vld [vmem:[%s3 + $0x30] sm:$0xff]
    %v199 = vld [vmem:[%s3 + $0x38] sm:$0xff]
    %v200 = vld [vmem:[%s3 + $0x40] sm:$0xff]
    %v201 = vld [vmem:[%s3 + $0x48] sm:$0xff]
    %v202 = vld [vmem:[%s3 + $0x50] sm:$0xff]
    %v203 = vld [vmem:[%s3 + $0x58] sm:$0xff]
    %v204 = vld [vmem:[%s3 + $0x60] sm:$0xff]
    %v205 = vld [vmem:[%s3 + $0x68] sm:$0xff]
    %v206 = vld [vmem:[%s3 + $0x70] sm:$0xff]
    %v207 = vld [vmem:[%s3 + $0x78] sm:$0xff]
    %v208 = vld [vmem:[%s3 + $0x80] sm:$0xff]
    %v209 = vld [vmem:[%s3 + $0x88] sm:$0xff]
    %v210 = vld [vmem:[%s3 + $0x90] sm:$0xff]
    %v211 = vld [vmem:[%s3 + $0x98] sm:$0xff]
    %v212 = vld [vmem:[%s3 + $0xa0] sm:$0xff]
    %v213 = vld [vmem:[%s3 + $0xa8] sm:$0xff]
    %v214 = vld [vmem:[%s3 + $0xb0] sm:$0xff]
    %v215 = vld [vmem:[%s3 + $0xb8] sm:$0xff]
    %v216 = vld [vmem:[%s3 + $0xc0] sm:$0xff]
    %v217 = vld [vmem:[%s3 + $0xc8] sm:$0xff]
    %v218 = vld [vmem:[%s3 + $0xd0] sm:$0xff]
    %v219 = vld [vmem:[%s3 + $0xd8] sm:$0xff]
    %v220 = vld [vmem:[%s3 + $0xe0] sm:$0xff]
    %v221 = vld [vmem:[%s3 + $0xe8] sm:$0xff]
    %v222 = vld [vmem:[%s3 + $0xf0] sm:$0xff]
    %v223 = vld [vmem:[%s3 + $0xf8] sm:$0xff]
    %224 = vmatprep.subr.mxu0 0.0
    %225 = vmatpush1.msra.mxu0 %v207
    %226 = vmatprep.subr.mxu0 0.0
    %227 = vmatpush1.msra.mxu0 %v206
    %228 = vmatprep.subr.mxu0 0.0
    %229 = vmatpush1.msra.mxu0 %v205
    %230 = vmatprep.subr.mxu0 0.0
    %231 = vmatpush1.msra.mxu0 %v204
    %232 = vmatprep.subr.mxu0 0.0
    %233 = vmatpush1.msra.mxu0 %v203
    %234 = vmatprep.subr.mxu0 0.0
    %235 = vmatpush1.msra.mxu0 %v202
    %236 = vmatprep.subr.mxu0 0.0
    %237 = vmatpush1.msra.mxu0 %v201
    %238 = vmatprep.subr.mxu0 0.0
    %239 = vmatpush1.msra.mxu0 %v200
    %240 = vmatprep.subr.mxu0 0.0
    %241 = vmatpush1.msra.mxu0 %v199
    %242 = vmatprep.subr.mxu0 0.0
    %243 = vmatpush1.msra.mxu0 %v198
    %244 = vmatprep.subr.mxu0 0.0
    %245 = vmatpush1.msra.mxu0 %v197
    %246 = vmatprep.subr.mxu0 0.0
    %247 = vmatpush1.msra.mxu0 %v196
    %248 = vmatprep.subr.mxu0 0.0
    %249 = vmatpush1.msra.mxu0 %v195
    %250 = vmatprep.subr.mxu0 0.0
    %251 = vmatpush1.msra.mxu0 %v194
    %252 = vmatprep.subr.mxu0 0.0
    %253 = vmatpush1.msra.mxu0 %v193
    %254 = vmatprep.subr.mxu0 0.0
    %255 = vmatpush1.msra.mxu0 %v192
    %256 = vmatprep.subr.mxu0 0.0
    %257 = vmatpush2.msra.mxu0 %v223
    %258 = vmatprep.subr.mxu0 0.0
    %259 = vmatpush2.msra.mxu0 %v222
    %260 = vmatprep.subr.mxu0 0.0
    %261 = vmatpush2.msra.mxu0 %v221
    %262 = vmatprep.subr.mxu0 0.0
    %263 = vmatpush2.msra.mxu0 %v220
    %264 = vmatprep.subr.mxu0 0.0
    %265 = vmatpush2.msra.mxu0 %v219
    %266 = vmatprep.subr.mxu0 0.0
    %267 = vmatpush2.msra.mxu0 %v218
    %268 = vmatprep.subr.mxu0 0.0
    %269 = vmatpush2.msra.mxu0 %v217
    %270 = vmatprep.subr.mxu0 0.0
    %271 = vmatpush2.msra.mxu0 %v216
    %272 = vmatprep.subr.mxu0 0.0
    %273 = vmatpush2.msra.mxu0 %v215
    %274 = vmatprep.subr.mxu0 0.0
    %275 = vmatpush2.msra.mxu0 %v214
    %276 = vmatprep.subr.mxu0 0.0
    %277 = vmatpush2.msra.mxu0 %v213
    %278 = vmatprep.subr.mxu0 0.0
    %279 = vmatpush2.msra.mxu0 %v212
    %280 = vmatprep.subr.mxu0 0.0
    %281 = vmatpush2.msra.mxu0 %v211
    %282 = vmatprep.subr.mxu0 0.0
    %283 = vmatpush2.msra.mxu0 %v210
    %284 = vmatprep.subr.mxu0 0.0
    %285 = vmatpush2.msra.mxu0 %v209
    %286 = vmatprep.subr.mxu0 0.0
    %287 = vmatpush2.msra.mxu0 %v208
    %288 = vmatprep.mubr.f32.mxu0 %v191
    %289 = vmatmul.mubr.f32.gmra.mxu0 %v190
    %v290 = vpop.f32.mrf.mxu0
    %v291 = vadd.f32 0.0, %v290
    %v292 = vpop.f32.mrf.mxu0
    %293 = vdwg.mxu0
    %vm294 = vcmask 64512
    %v295 = vsel %vm294, %v291, -inf
    %296 = vmax.xlane.f32.xlu0 %v295
    %v297 = vpop.xlane.xlu0 %296
    %v298 = vsub.f32 %v291, %v297
    %v299 = vmul.f32 %v298, 1.442695
    %v300 = vpow.pop %v299
    %v301 = vsel %vm294, %v300, 0.0
    %302 = vadd.xlane.f32.xlu0 %v301
    %v303 = vpop.xlane.xlu0 %302
    %v304 = vrcp.pop %v303
    %v305 = vmul.f32 1.0, %v304
    %v306 = vmul.f32 %v300, %v305
    %v307 = vld [vmem:[%s4] sm:$0xff]
    %v308 = vld [vmem:[%s4 + $0x8] sm:$0xff]
    %v310 = vsel %vm294, %v306, 0
    %312 = vmatprep.subr.mxu0 0.0
    %313 = vmatpush1.msra.mxu0 0.0
    %314 = vmatprep.subr.mxu0 0.0
    %315 = vmatpush1.msra.mxu0 0.0
    %316 = vmatprep.subr.mxu0 0.0
    %317 = vmatpush1.msra.mxu0 0.0
    %318 = vmatprep.subr.mxu0 0.0
    %319 = vmatpush1.msra.mxu0 0.0
    %320 = vmatprep.subr.mxu0 0.0
    %321 = vmatpush1.msra.mxu0 0.0
    %322 = vmatprep.subr.mxu0 0.0
    %323 = vmatpush1.msra.mxu0 0.0
    %324 = vmatprep.subr.mxu0 0.0
    %325 = vmatpush1.msra.mxu0 0.0
    %326 = vmatprep.subr.mxu0 0.0
    %327 = vmatpush1.msra.mxu0 0.0
    %328 = vmatprep.subr.mxu0 0.0
    %329 = vmatpush1.msra.mxu0 0.0
    %330 = vmatprep.subr.mxu0 0.0
    %331 = vmatpush1.msra.mxu0 0.0
    %332 = vmatprep.subr.mxu0 0.0
    %333 = vmatpush1.msra.mxu0 0.0
    %334 = vmatprep.subr.mxu0 0.0
    %335 = vmatpush1.msra.mxu0 0.0
    %336 = vmatprep.subr.mxu0 0.0
    %337 = vmatpush1.msra.mxu0 0.0
    %338 = vmatprep.subr.mxu0 0.0
    %339 = vmatpush1.msra.mxu0 0.0
    %340 = vmatprep.subr.mxu0 0.0
    %341 = vmatpush1.msra.mxu0 0.0
    %342 = vmatprep.subr.mxu0 %v308
    %343 = vmatpush1.msra.mxu0 %v307
    %344 = vmatprep.subr.mxu0 0.0
    %345 = vmatpush2.msra.mxu0 0.0
    %346 = vmatprep.subr.mxu0 0.0
    %347 = vmatpush2.msra.mxu0 0.0
    %348 = vmatprep.subr.mxu0 0.0
    %349 = vmatpush2.msra.mxu0 0.0
    %350 = vmatprep.subr.mxu0 0.0
    %351 = vmatpush2.msra.mxu0 0.0
    %352 = vmatprep.subr.mxu0 0.0
    %353 = vmatpush2.msra.mxu0 0.0
    %354 = vmatprep.subr.mxu0 0.0
    %355 = vmatpush2.msra.mxu0 0.0
    %356 = vmatprep.subr.mxu0 0.0
    %357 = vmatpush2.msra.mxu0 0.0
    %358 = vmatprep.subr.mxu0 0.0
    %359 = vmatpush2.msra.mxu0 0.0
    %360 = vmatprep.subr.mxu0 0.0
    %361 = vmatpush2.msra.mxu0 0.0
    %362 = vmatprep.subr.mxu0 0.0
    %363 = vmatpush2.msra.mxu0 0.0
    %364 = vmatprep.subr.mxu0 0.0
    %365 = vmatpush2.msra.mxu0 0.0
    %366 = vmatprep.subr.mxu0 0.0
    %367 = vmatpush2.msra.mxu0 0.0
    %368 = vmatprep.subr.mxu0 0.0
    %369 = vmatpush2.msra.mxu0 0.0
    %370 = vmatprep.subr.mxu0 0.0
    %371 = vmatpush2.msra.mxu0 0.0
    %372 = vmatprep.subr.mxu0 0.0
    %373 = vmatpush2.msra.mxu0 0.0
    %374 = vmatprep.subr.mxu0 0.0
    %375 = vmatpush2.msra.mxu0 0.0
    %376 = vmatprep.mubr.f32.mxu0 0.0
    %377 = vmatmul.mubr.f32.gmra.mxu0 %v310
    %v378 = vpop.f32.mrf.mxu0
    %v379 = vadd.f32 0.0, %v378
    %v380 = vpop.f32.mrf.mxu0
    %v381 = vadd.f32 0.0, %v380
    %382 = vdwg.mxu0
    %v383 = vmul.f32 %v379, %v190
    %v384 = vmul.f32 %v381, %v191
    %v385 = vld [vmem:[%s5] sm:$0xff]
    %v386 = vld [vmem:[%s5 + $0x8] sm:$0xff]
    %v387 = vld [vmem:[%s5 + $0x10] sm:$0xff]
    %v388 = vld [vmem:[%s5 + $0x18] sm:$0xff]
    %v389 = vld [vmem:[%s5 + $0x20] sm:$0xff]
    %v390 = vld [vmem:[%s5 + $0x28] sm:$0xff]
    %v391 = vld [vmem:[%s5 + $0x30] sm:$0xff]
    %v392 = vld [vmem:[%s5 + $0x38] sm:$0xff]
    %v393 = vld [vmem:[%s5 + $0x40] sm:$0xff]
    %v394 = vld [vmem:[%s5 + $0x48] sm:$0xff]
    %v395 = vld [vmem:[%s5 + $0x50] sm:$0xff]
    %v396 = vld [vmem:[%s5 + $0x58] sm:$0xff]
    %v397 = vld [vmem:[%s5 + $0x60] sm:$0xff]
    %v398 = vld [vmem:[%s5 + $0x68] sm:$0xff]
    %v399 = vld [vmem:[%s5 + $0x70] sm:$0xff]
    %v400 = vld [vmem:[%s5 + $0x78] sm:$0xff]
    %v401 = vld [vmem:[%s5 + $0x80] sm:$0xff]
    %v402 = vld [vmem:[%s5 + $0x88] sm:$0xff]
    %v403 = vld [vmem:[%s5 + $0x90] sm:$0xff]
    %v404 = vld [vmem:[%s5 + $0x98] sm:$0xff]
    %v405 = vld [vmem:[%s5 + $0xa0] sm:$0xff]
    %v406 = vld [vmem:[%s5 + $0xa8] sm:$0xff]
    %v407 = vld [vmem:[%s5 + $0xb0] sm:$0xff]
    %v408 = vld [vmem:[%s5 + $0xb8] sm:$0xff]
    %v409 = vld [vmem:[%s5 + $0xc0] sm:$0xff]
    %v410 = vld [vmem:[%s5 + $0xc8] sm:$0xff]
    %v411 = vld [vmem:[%s5 + $0xd0] sm:$0xff]
    %v412 = vld [vmem:[%s5 + $0xd8] sm:$0xff]
    %v413 = vld [vmem:[%s5 + $0xe0] sm:$0xff]
    %v414 = vld [vmem:[%s5 + $0xe8] sm:$0xff]
    %v415 = vld [vmem:[%s5 + $0xf0] sm:$0xff]
    %v416 = vld [vmem:[%s5 + $0xf8] sm:$0xff]
    %v417 = vld [vmem:[%s6] sm:$0x1]
    %v419 = vlaneseq
    %v420 = vshrl.u32 %v419, 7
    %v421 = vsub.s32 0, %v420
    %v422 = vrot.slane %v417, %v421
    %424 = vmatprep.subr.mxu0 0.0
    %425 = vmatpush1.msra.mxu0 %v400
    %426 = vmatprep.subr.mxu0 0.0
    %427 = vmatpush1.msra.mxu0 %v399
    %428 = vmatprep.subr.mxu0 0.0
    %429 = vmatpush1.msra.mxu0 %v398
    %430 = vmatprep.subr.mxu0 0.0
    %431 = vmatpush1.msra.mxu0 %v397
    %432 = vmatprep.subr.mxu0 0.0
    %433 = vmatpush1.msra.mxu0 %v396
    %434 = vmatprep.subr.mxu0 0.0
    %435 = vmatpush1.msra.mxu0 %v395
    %436 = vmatprep.subr.mxu0 0.0
    %437 = vmatpush1.msra.mxu0 %v394
    %438 = vmatprep.subr.mxu0 0.0
    %439 = vmatpush1.msra.mxu0 %v393
    %440 = vmatprep.subr.mxu0 0.0
    %441 = vmatpush1.msra.mxu0 %v392
    %442 = vmatprep.subr.mxu0 0.0
    %443 = vmatpush1.msra.mxu0 %v391
    %444 = vmatprep.subr.mxu0 0.0
    %445 = vmatpush1.msra.mxu0 %v390
    %446 = vmatprep.subr.mxu0 0.0
    %447 = vmatpush1.msra.mxu0 %v389
    %448 = vmatprep.subr.mxu0 0.0
    %449 = vmatpush1.msra.mxu0 %v388
    %450 = vmatprep.subr.mxu0 0.0
    %451 = vmatpush1.msra.mxu0 %v387
    %452 = vmatprep.subr.mxu0 0.0
    %453 = vmatpush1.msra.mxu0 %v386
    %454 = vmatprep.subr.mxu0 0.0
    %455 = vmatpush1.msra.mxu0 %v385
    %456 = vmatprep.subr.mxu0 0.0
    %457 = vmatpush2.msra.mxu0 %v416
    %458 = vmatprep.subr.mxu0 0.0
    %459 = vmatpush2.msra.mxu0 %v415
    %460 = vmatprep.subr.mxu0 0.0
    %461 = vmatpush2.msra.mxu0 %v414
    %462 = vmatprep.subr.mxu0 0.0
    %463 = vmatpush2.msra.mxu0 %v413
    %464 = vmatprep.subr.mxu0 0.0
    %465 = vmatpush2.msra.mxu0 %v412
    %466 = vmatprep.subr.mxu0 0.0
    %467 = vmatpush2.msra.mxu0 %v411
    %468 = vmatprep.subr.mxu0 0.0
    %469 = vmatpush2.msra.mxu0 %v410
    %470 = vmatprep.subr.mxu0 0.0
    %471 = vmatpush2.msra.mxu0 %v409
    %472 = vmatprep.subr.mxu0 0.0
    %473 = vmatpush2.msra.mxu0 %v408
    %474 = vmatprep.subr.mxu0 0.0
    %475 = vmatpush2.msra.mxu0 %v407
    %476 = vmatprep.subr.mxu0 0.0
    %477 = vmatpush2.msra.mxu0 %v406
    %478 = vmatprep.subr.mxu0 0.0
    %479 = vmatpush2.msra.mxu0 %v405
    %480 = vmatprep.subr.mxu0 0.0
    %481 = vmatpush2.msra.mxu0 %v404
    %482 = vmatprep.subr.mxu0 0.0
    %483 = vmatpush2.msra.mxu0 %v403
    %484 = vmatprep.subr.mxu0 0.0
    %485 = vmatpush2.msra.mxu0 %v402
    %486 = vmatprep.subr.mxu0 0.0
    %487 = vmatpush2.msra.mxu0 %v401
    %488 = vmatprep.mubr.f32.mxu0 %v384
    %489 = vmatmul.mubr.f32.gmra.mxu0 %v383
    %v490 = vpop.f32.mrf.mxu0
    %v491 = vadd.f32 %v422, %v490
    %v492 = vpop.f32.mrf.mxu0
    %493 = vdwg.mxu0
    %vm494 = vcmp.gt.f32.partialorder %v491, 0.0
    %v495 = vmul.f32 %v491, 0.01
    %v496 = vsel %vm494, %v491, %v495
    %v497 = vld [vmem:[%s7] sm:$0xff]
    %v498 = vld [vmem:[%s7 + $0x8] sm:$0xff]
    %v499 = vld [vmem:[%s8] sm:$0x1]
    %v501 = vlaneseq
    %v502 = vshrl.u32 %v501, 7
    %v503 = vsub.s32 0, %v502
    %v504 = vrot.slane %v499, %v503
    %vm506 = vcmask 130048
    %v508 = vsel %vm506, %v496, 0
    %510 = vmatprep.subr.mxu0 0.0
    %511 = vmatpush1.msra.mxu0 0.0
    %512 = vmatprep.subr.mxu0 0.0
    %513 = vmatpush1.msra.mxu0 0.0
    %514 = vmatprep.subr.mxu0 0.0
    %515 = vmatpush1.msra.mxu0 0.0
    %516 = vmatprep.subr.mxu0 0.0
    %517 = vmatpush1.msra.mxu0 0.0
    %518 = vmatprep.subr.mxu0 0.0
    %519 = vmatpush1.msra.mxu0 0.0
    %520 = vmatprep.subr.mxu0 0.0
    %521 = vmatpush1.msra.mxu0 0.0
    %522 = vmatprep.subr.mxu0 0.0
    %523 = vmatpush1.msra.mxu0 0.0
    %524 = vmatprep.subr.mxu0 0.0
    %525 = vmatpush1.msra.mxu0 0.0
    %526 = vmatprep.subr.mxu0 0.0
    %527 = vmatpush1.msra.mxu0 0.0
    %528 = vmatprep.subr.mxu0 0.0
    %529 = vmatpush1.msra.mxu0 0.0
    %530 = vmatprep.subr.mxu0 0.0
    %531 = vmatpush1.msra.mxu0 0.0
    %532 = vmatprep.subr.mxu0 0.0
    %533 = vmatpush1.msra.mxu0 0.0
    %534 = vmatprep.subr.mxu0 0.0
    %535 = vmatpush1.msra.mxu0 0.0
    %536 = vmatprep.subr.mxu0 0.0
    %537 = vmatpush1.msra.mxu0 0.0
    %538 = vmatprep.subr.mxu0 0.0
    %539 = vmatpush1.msra.mxu0 %v498
    %540 = vmatprep.subr.mxu0 0.0
    %541 = vmatpush1.msra.mxu0 %v497
    %542 = vmatprep.subr.mxu0 0.0
    %543 = vmatpush2.msra.mxu0 0.0
    %544 = vmatprep.subr.mxu0 0.0
    %545 = vmatpush2.msra.mxu0 0.0
    %546 = vmatprep.subr.mxu0 0.0
    %547 = vmatpush2.msra.mxu0 0.0
    %548 = vmatprep.subr.mxu0 0.0
    %549 = vmatpush2.msra.mxu0 0.0
    %550 = vmatprep.subr.mxu0 0.0
    %551 = vmatpush2.msra.mxu0 0.0
    %552 = vmatprep.subr.mxu0 0.0
    %553 = vmatpush2.msra.mxu0 0.0
    %554 = vmatprep.subr.mxu0 0.0
    %555 = vmatpush2.msra.mxu0 0.0
    %556 = vmatprep.subr.mxu0 0.0
    %557 = vmatpush2.msra.mxu0 0.0
    %558 = vmatprep.subr.mxu0 0.0
    %559 = vmatpush2.msra.mxu0 0.0
    %560 = vmatprep.subr.mxu0 0.0
    %561 = vmatpush2.msra.mxu0 0.0
    %562 = vmatprep.subr.mxu0 0.0
    %563 = vmatpush2.msra.mxu0 0.0
    %564 = vmatprep.subr.mxu0 0.0
    %565 = vmatpush2.msra.mxu0 0.0
    %566 = vmatprep.subr.mxu0 0.0
    %567 = vmatpush2.msra.mxu0 0.0
    %568 = vmatprep.subr.mxu0 0.0
    %569 = vmatpush2.msra.mxu0 0.0
    %570 = vmatprep.subr.mxu0 0.0
    %571 = vmatpush2.msra.mxu0 0.0
    %572 = vmatprep.subr.mxu0 0.0
    %573 = vmatpush2.msra.mxu0 0.0
    %574 = vmatprep.mubr.f32.mxu0 0.0
    %575 = vmatmul.mubr.f32.gmra.mxu0 %v508
    %v576 = vpop.f32.mrf.mxu0
    %v577 = vadd.f32 %v504, %v576
    %v578 = vpop.f32.mrf.mxu0
    %579 = vdwg.mxu0
    %vm580 = vcmp.gt.f32.partialorder %v577, 0.0
    %v581 = vmul.f32 %v577, 0.01
    %v582 = vsel %vm580, %v577, %v581
    %v583 = vld [vmem:[%s9] sm:$0xff]
    %v584 = vld [vmem:[%s9 + $0x8] sm:$0xff]
    %v585 = vld [vmem:[%s10] sm:$0x1]
    %v587 = vlaneseq
    %v588 = vshrl.u32 %v587, 7
    %v589 = vsub.s32 0, %v588
    %v590 = vrot.slane %v585, %v589
    %v593 = vsel %vm506, %v582, 0
    %595 = vmatprep.subr.mxu0 0.0
    %596 = vmatpush1.msra.mxu0 0.0
    %597 = vmatprep.subr.mxu0 0.0
    %598 = vmatpush1.msra.mxu0 0.0
    %599 = vmatprep.subr.mxu0 0.0
    %600 = vmatpush1.msra.mxu0 0.0
    %601 = vmatprep.subr.mxu0 0.0
    %602 = vmatpush1.msra.mxu0 0.0
    %603 = vmatprep.subr.mxu0 0.0
    %604 = vmatpush1.msra.mxu0 0.0
    %605 = vmatprep.subr.mxu0 0.0
    %606 = vmatpush1.msra.mxu0 0.0
    %607 = vmatprep.subr.mxu0 0.0
    %608 = vmatpush1.msra.mxu0 0.0
    %609 = vmatprep.subr.mxu0 0.0
    %610 = vmatpush1.msra.mxu0 0.0
    %611 = vmatprep.subr.mxu0 0.0
    %612 = vmatpush1.msra.mxu0 0.0
    %613 = vmatprep.subr.mxu0 0.0
    %614 = vmatpush1.msra.mxu0 0.0
    %615 = vmatprep.subr.mxu0 0.0
    %616 = vmatpush1.msra.mxu0 0.0
    %617 = vmatprep.subr.mxu0 0.0
    %618 = vmatpush1.msra.mxu0 0.0
    %619 = vmatprep.subr.mxu0 0.0
    %620 = vmatpush1.msra.mxu0 0.0
    %621 = vmatprep.subr.mxu0 0.0
    %622 = vmatpush1.msra.mxu0 0.0
    %623 = vmatprep.subr.mxu0 0.0
    %624 = vmatpush1.msra.mxu0 %v584
    %625 = vmatprep.subr.mxu0 0.0
    %626 = vmatpush1.msra.mxu0 %v583
    %627 = vmatprep.subr.mxu0 0.0
    %628 = vmatpush2.msra.mxu0 0.0
    %629 = vmatprep.subr.mxu0 0.0
    %630 = vmatpush2.msra.mxu0 0.0
    %631 = vmatprep.subr.mxu0 0.0
    %632 = vmatpush2.msra.mxu0 0.0
    %633 = vmatprep.subr.mxu0 0.0
    %634 = vmatpush2.msra.mxu0 0.0
    %635 = vmatprep.subr.mxu0 0.0
    %636 = vmatpush2.msra.mxu0 0.0
    %637 = vmatprep.subr.mxu0 0.0
    %638 = vmatpush2.msra.mxu0 0.0
    %639 = vmatprep.subr.mxu0 0.0
    %640 = vmatpush2.msra.mxu0 0.0
    %641 = vmatprep.subr.mxu0 0.0
    %642 = vmatpush2.msra.mxu0 0.0
    %643 = vmatprep.subr.mxu0 0.0
    %644 = vmatpush2.msra.mxu0 0.0
    %645 = vmatprep.subr.mxu0 0.0
    %646 = vmatpush2.msra.mxu0 0.0
    %647 = vmatprep.subr.mxu0 0.0
    %648 = vmatpush2.msra.mxu0 0.0
    %649 = vmatprep.subr.mxu0 0.0
    %650 = vmatpush2.msra.mxu0 0.0
    %651 = vmatprep.subr.mxu0 0.0
    %652 = vmatpush2.msra.mxu0 0.0
    %653 = vmatprep.subr.mxu0 0.0
    %654 = vmatpush2.msra.mxu0 0.0
    %655 = vmatprep.subr.mxu0 0.0
    %656 = vmatpush2.msra.mxu0 0.0
    %657 = vmatprep.subr.mxu0 0.0
    %658 = vmatpush2.msra.mxu0 0.0
    %659 = vmatprep.mubr.f32.mxu0 0.0
    %660 = vmatmul.mubr.f32.gmra.mxu0 %v593
    %v661 = vpop.f32.mrf.mxu0
    %v662 = vadd.f32 %v590, %v661
    %v663 = vpop.f32.mrf.mxu0
    %664 = vdwg.mxu0
    %665 = vst.msk [vmem:[#allocation2] sm:$0xff] %vm294, %v662
    // Predicated region
    $region46: #{tpu_custom_call.1} parent=1 // pred_check
      _
    $region47: #{tpu_custom_call.1} parent=1 // pred_check_branch
      %667 = sbr.rel (0) target = $region49
    $region48: #{tpu_custom_call.1} parent=1 // pred_region
      %s669 = ssub.s32 128, 128
      %670 = vsyncadd [#allocation3], %s669
      %s672 = sshll.u32 [#allocation2], 4
      %s673 = int_to_ptr.vmem [resolvable:$true] %s672
      %675 = dma.vmem_to_hbm [thread:$0]  %s673, 128, %s11, [#allocation3]
    $region49: #{tpu_custom_call.1} parent=1 // pred_fallthru
      _
    // Predicated region
    $region50: #{tpu_custom_call.1} parent=1 // pred_check
      _
    $region51: #{tpu_custom_call.1} parent=1 // pred_check_branch
      %677 = sbr.rel (0) target = $region53
    $region52: #{tpu_custom_call.1} parent=1 // pred_region
      %678 = dma.done [#allocation3], 128
    $region53: #{tpu_custom_call.1} parent=1 // pred_fallthru
      _
    %679 = vsyncpa [#allocation3], 1

</llo_original>
